<compile_context>
chip_gen: v5e
topology: v5e:2x2
jax: 0.10.0
libtpu: 0.0.40
codegen_flags: <defaults>
</compile_context>

<pallas_src>
import numpy as np
import jax
import jax.numpy as jnp
from jax import lax
from jax.experimental import pallas as pl
from jax.experimental.pallas import tpu as pltpu

# Match torch: PI = acos(tensor(-1.0)) in float32.
PI = float(np.arccos(np.float32(-1.0)))
_LANE = 128


def _ortho_vector(vec):
    """Host-side glue (init-time), mirrors otho_vector from the torch code."""
    x, y, z = [float(t) for t in vec]
    if abs(x) >= max(abs(y), abs(z)):
        ret = np.array([-y - z, x, x], dtype=np.float32)
    elif abs(y) >= max(abs(x), abs(z)):
        ret = np.array([y, -x - z, y], dtype=np.float32)
    else:
        ret = np.array([z, z, -x - y], dtype=np.float32)
    return ret / np.linalg.norm(ret)


# ---------------------------------------------------------------------------
# Kernels
# ---------------------------------------------------------------------------
def _vector_free_kernel(u_ref, v_ref, o_ref):
    # u_ref, v_ref: VMEM f32[1, 128]; o_ref: VMEM f32[3, 128]
    u = u_ref[...]
    v = v_ref[...]
    # torch .fmod(1): truncation-style remainder
    u = u - jnp.trunc(u)
    v = v - jnp.trunc(v)

    theta = (2.0 * PI) * u
    z = jnp.clip(2.0 * v - 1.0, -1.0, 1.0)            # z == cos(arccos(.))
    sin_phi = jnp.sqrt(jnp.maximum(1.0 - z * z, 0.0))  # sin(arccos(.))

    # x^2 + y^2 + z^2 == 1 analytically -> no normalization needed.
    o_ref[0:1, :] = jnp.cos(theta) * sin_phi
    o_ref[1:2, :] = jnp.sin(theta) * sin_phi
    o_ref[2:3, :] = z


def _vector_fixed_kernel(axis_ref, base_ref, u_ref, o_ref):
    # axis_ref, base_ref: SMEM f32[3]; u_ref: VMEM f32[1, 128]
    # o_ref: VMEM f32[3, 128]
    ax, ay, az = axis_ref[0], axis_ref[1], axis_ref[2]
    bx, by, bz = base_ref[0], base_ref[1], base_ref[2]

    # Pure-scalar coefficients of  comp = c0 + c1*Cos + c2*Sin  (computed once
    # on the scalar unit; exact refactor of the torch expression).
    dot = ax * bx + ay * by + az * bz
    c1x = (ay * ay + az * az) * bx - ax * ay * by - ax * az * bz
    c0x = bx - c1x
    c2x = ay * bz - az * by

    c0y = ay * dot
    c1y = by - ay * dot
    c2y = az * bx - ax * bz

    c0z = az * dot
    c1z = bz - az * dot
    c2z = ax * by - ay * bx

    u = u_ref[...]
    u = u - jnp.trunc(u)          # torch .fmod(1)
    theta = (2.0 * PI) * u
    Sin = jnp.sin(theta)
    Cos = jnp.cos(theta)

    x = c0x + c1x * Cos + c2x * Sin
    y = c0y + c1y * Cos + c2y * Sin
    z = c0z + c1z * Cos + c2z * Sin

    inv = lax.rsqrt(x * x + y * y + z * z)   # one EUP op instead of sqrt+div
    o_ref[0:1, :] = x * inv
    o_ref[1:2, :] = y * inv
    o_ref[2:3, :] = z * inv


# ---------------------------------------------------------------------------
# Wrappers
# ---------------------------------------------------------------------------
def _pad_to_lane_tiles(x2d):
    n = x2d.shape[1]
    n_pad = max(_LANE, ((n + _LANE - 1) // _LANE) * _LANE)
    if n_pad != n:
        x2d = jnp.pad(x2d, ((0, 0), (0, n_pad - n)))
    return x2d, n, n_pad


def vector_forward_free(u, v):
    """fixed=None branch. u, v: scalars or 1-D batches -> (3,) or (3, N)."""
    u = jnp.asarray(u, jnp.float32)
    v = jnp.asarray(v, jnp.float32)
    single = (u.ndim == 0)
    u2 = jnp.atleast_1d(u).reshape(1, -1)
    v2 = jnp.atleast_1d(v).reshape(1, -1)
    u2, n, n_pad = _pad_to_lane_tiles(u2)
    v2, _, _ = _pad_to_lane_tiles(v2)

    out = pl.pallas_call(
        _vector_free_kernel,
        out_shape=jax.ShapeDtypeStruct((3, n_pad), jnp.float32),
        grid=(n_pad // _LANE,),
        in_specs=[pl.BlockSpec((1, _LANE), lambda i: (0, i)),
                  pl.BlockSpec((1, _LANE), lambda i: (0, i))],
        out_specs=pl.BlockSpec((3, _LANE), lambda i: (0, i)),
        compiler_params=pltpu.CompilerParams(
            dimension_semantics=("parallel",)),
    )(u2, v2)
    out = out[:, :n]
    return out[:, 0] if single else out


def vector_forward_fixed(u, axis, base):
    """fixed=(x,y,z) branch: rotate `base` around `axis` by 2*pi*u."""
    u = jnp.asarray(u, jnp.float32)
    axis = jnp.asarray(axis, jnp.float32).reshape(3)
    base = jnp.asarray(base, jnp.float32).reshape(3)
    single = (u.ndim == 0)
    u2 = jnp.atleast_1d(u).reshape(1, -1)
    u2, n, n_pad = _pad_to_lane_tiles(u2)

    out = pl.pallas_call(
        _vector_fixed_kernel,
        out_shape=jax.ShapeDtypeStruct((3, n_pad), jnp.float32),
        grid=(n_pad // _LANE,),
        in_specs=[pl.BlockSpec(memory_space=pltpu.MemorySpace.SMEM),
                  pl.BlockSpec(memory_space=pltpu.MemorySpace.SMEM),
                  pl.BlockSpec((1, _LANE), lambda i: (0, i))],
        out_specs=pl.BlockSpec((3, _LANE), lambda i: (0, i)),
        compiler_params=pltpu.CompilerParams(
            dimension_semantics=("parallel",)),
    )(axis, base, u2)
    out = out[:, :n]
    return out[:, 0] if single else out


# ---------------------------------------------------------------------------
# Pure-JAX references (literal transcription of the torch forward)
# ---------------------------------------------------------------------------
def _reference_free(u, v):
    u = u - jnp.trunc(u)
    v = v - jnp.trunc(v)
    theta = 2.0 * PI * u
    phi = jnp.arccos(jnp.clip(2.0 * v - 1.0, -1.0, 1.0))
    sin_phi = jnp.sin(phi)
    x = jnp.cos(theta) * sin_phi
    y = jnp.sin(theta) * sin_phi
    z = jnp.cos(phi)
    vec = jnp.stack([x, y, z], axis=0)
    return vec / jnp.linalg.norm(vec, axis=0, keepdims=True)


def _reference_fixed(u, axis, base):
    u = u - jnp.trunc(u)
    theta = 2.0 * PI * u
    ax, ay, az = axis
    bx, by, bz = base
    Sin = jnp.sin(theta)
    Cos = jnp.cos(theta)
    x = (bx + ay ** 2 * bx * (-1 + Cos) + az ** 2 * bx * (-1 + Cos)
         + ax * ay * (by - by * Cos) + ax * az * (bz - bz * Cos)
         - az * by * Sin + ay * bz * Sin)
    y = (ay * (ax * bx + ay * by + az * bz)
         - (ax * ay * bx + (-1 + ay ** 2) * by + ay * az * bz) * Cos
         + (az * bx - ax * bz) * Sin)
    z = (az * (ax * bx + ay * by + az * bz)
         - (ax * az * bx + ay * az * by + (-1 + az ** 2) * bz) * Cos
         + (-(ay * bx) + ax * by) * Sin)
    vec = jnp.stack([x, y, z], axis=0)
    return vec / jnp.linalg.norm(vec, axis=0, keepdims=True)


if __name__ == "__main__":
    key = jax.random.PRNGKey(0)
    ku, kv, kuf = jax.random.split(key, 3)

    N = 256  # batch of independent Vector instances (2 lane tiles -> grid)

    # --- fixed=None mode (batched) ---------------------------------------
    u_free = jax.random.uniform(ku, (N,), dtype=jnp.float32)
    v_free = jax.random.uniform(kv, (N,), dtype=jnp.float32)
    out_free = jax.block_until_ready(vector_forward_free(u_free, v_free))
    ref_free = _reference_free(u_free, v_free)
    assert out_free.shape == (3, N)
    assert bool(jnp.all(jnp.isfinite(out_free)))
    assert float(jnp.max(jnp.abs(out_free - ref_free))) < 1e-5
    assert float(jnp.max(jnp.abs(
        jnp.linalg.norm(out_free, axis=0) - 1.0))) < 1e-4

    # --- fixed=(x, y, z) mode (batched) ----------------------------------
    fixed = np.array([1.0, 2.0, 2.0], dtype=np.float32)
    axis = fixed / np.linalg.norm(fixed)
    base = _ortho_vector(axis)
    assert abs(float((base * axis).sum())) < 1e-5
    u_fixed = jax.random.uniform(kuf, (N,), dtype=jnp.float32)
    out_fixed = jax.block_until_ready(vector_forward_fixed(u_fixed, axis, base))
    ref_fixed = _reference_fixed(u_fixed, jnp.asarray(axis), jnp.asarray(base))
    assert out_fixed.shape == (3, N)
    assert bool(jnp.all(jnp.isfinite(out_fixed)))
    assert float(jnp.max(jnp.abs(out_fixed - ref_fixed))) < 1e-5
    assert float(jnp.max(jnp.abs(
        jnp.linalg.norm(out_fixed, axis=0) - 1.0))) < 1e-4

    # --- single-instance path (matches the original nn.Module forward) ---
    vec_single = jax.block_until_ready(
        vector_forward_free(u_free[0], v_free[0]))
    assert vec_single.shape == (3,)
    assert float(jnp.max(jnp.abs(vec_single - ref_free[:, 0]))) < 1e-5

    vec_single_fixed = jax.block_until_ready(
        vector_forward_fixed(u_fixed[0], axis, base))
    assert vec_single_fixed.shape == (3,)
    assert float(jnp.max(jnp.abs(vec_single_fixed - ref_fixed[:, 0]))) < 1e-5

    print("KERNEL_OK")
</pallas_src>

<mosaic_0001>
module attributes {stable_mosaic.version = 11 : i64} {
  func.func @_vector_free_kernel(%arg0: i32, %arg1: memref<1x128xf32, #tpu.memory_space<vmem>>, %arg2: memref<1x128xf32, #tpu.memory_space<vmem>>, %arg3: memref<3x128xf32, #tpu.memory_space<vmem>>) attributes {dimension_semantics = [#tpu.dimension_semantics<parallel>], iteration_bounds = array<i64: 2>, scalar_prefetch = 0 : i64, scratch_operands = 0 : i64, tpu.core_type = #tpu.core_type<tc>, window_params = [{transform_indices = @transform_0, window_bounds = array<i64: 1, 128>}, {transform_indices = @transform_1, window_bounds = array<i64: 1, 128>}, {transform_indices = @transform_2, window_bounds = array<i64: 3, 128>}]} {
    %c0 = arith.constant 0 : index
    %c0_0 = arith.constant 0 : index
    %0 = vector.load %arg1[%c0, %c0_0] : memref<1x128xf32, #tpu.memory_space<vmem>>, vector<1x128xf32>
    %c0_1 = arith.constant 0 : index
    %c0_2 = arith.constant 0 : index
    %1 = vector.load %arg2[%c0_1, %c0_2] : memref<1x128xf32, #tpu.memory_space<vmem>>, vector<1x128xf32>
    %cst = arith.constant 0.000000e+00 : f32
    %2 = vector.broadcast %cst : f32 to vector<1x128xf32>
    %3 = arith.cmpf olt, %0, %2 : vector<1x128xf32>
    %4 = math.ceil %0 : vector<1x128xf32>
    %5 = math.floor %0 : vector<1x128xf32>
    %6 = arith.select %3, %4, %5 : vector<1x128xi1>, vector<1x128xf32>
    %7 = arith.subf %0, %6 : vector<1x128xf32>
    %cst_3 = arith.constant 0.000000e+00 : f32
    %8 = vector.broadcast %cst_3 : f32 to vector<1x128xf32>
    %9 = arith.cmpf olt, %1, %8 : vector<1x128xf32>
    %10 = math.ceil %1 : vector<1x128xf32>
    %11 = math.floor %1 : vector<1x128xf32>
    %12 = arith.select %9, %10, %11 : vector<1x128xi1>, vector<1x128xf32>
    %13 = arith.subf %1, %12 : vector<1x128xf32>
    %cst_4 = arith.constant 6.28318548 : f32
    %14 = vector.broadcast %cst_4 : f32 to vector<1x128xf32>
    %15 = arith.mulf %14, %7 : vector<1x128xf32>
    %cst_5 = arith.constant 2.000000e+00 : f32
    %16 = vector.broadcast %cst_5 : f32 to vector<1x128xf32>
    %17 = arith.mulf %16, %13 : vector<1x128xf32>
    %cst_6 = arith.constant 1.000000e+00 : f32
    %18 = vector.broadcast %cst_6 : f32 to vector<1x128xf32>
    %19 = arith.subf %17, %18 : vector<1x128xf32>
    %cst_7 = arith.constant -1.000000e+00 : f32
    %cst_8 = arith.constant 1.000000e+00 : f32
    %20 = vector.broadcast %cst_7 : f32 to vector<1x128xf32>
    %21 = arith.maximumf %20, %19 : vector<1x128xf32>
    %22 = vector.broadcast %cst_8 : f32 to vector<1x128xf32>
    %23 = arith.minimumf %22, %21 : vector<1x128xf32>
    %24 = arith.mulf %23, %23 : vector<1x128xf32>
    %cst_9 = arith.constant 1.000000e+00 : f32
    %25 = vector.broadcast %cst_9 : f32 to vector<1x128xf32>
    %26 = arith.subf %25, %24 : vector<1x128xf32>
    %cst_10 = arith.constant 0.000000e+00 : f32
    %27 = vector.broadcast %cst_10 : f32 to vector<1x128xf32>
    %28 = arith.maximumf %26, %27 : vector<1x128xf32>
    %29 = math.sqrt %28 : vector<1x128xf32>
    %30 = math.cos %15 : vector<1x128xf32>
    %31 = arith.mulf %30, %29 : vector<1x128xf32>
    %c0_11 = arith.constant 0 : index
    %c0_12 = arith.constant 0 : index
    %32 = vector.load %arg3[%c0_11, %c0_12] : memref<3x128xf32, #tpu.memory_space<vmem>>, vector<1x128xf32>
    tpu.vector_store %arg3[%c0_11, %c0_12], %31 {strides = array<i32>} : memref<3x128xf32, #tpu.memory_space<vmem>>, vector<1x128xf32>,
    %33 = math.sin %15 : vector<1x128xf32>
    %34 = arith.mulf %33, %29 : vector<1x128xf32>
    %c1 = arith.constant 1 : index
    %c0_13 = arith.constant 0 : index
    %35 = vector.load %arg3[%c1, %c0_13] : memref<3x128xf32, #tpu.memory_space<vmem>>, vector<1x128xf32>
    tpu.vector_store %arg3[%c1, %c0_13], %34 {strides = array<i32>} : memref<3x128xf32, #tpu.memory_space<vmem>>, vector<1x128xf32>,
    %c2 = arith.constant 2 : index
    %c0_14 = arith.constant 0 : index
    %36 = vector.load %arg3[%c2, %c0_14] : memref<3x128xf32, #tpu.memory_space<vmem>>, vector<1x128xf32>
    tpu.vector_store %arg3[%c2, %c0_14], %23 {strides = array<i32>} : memref<3x128xf32, #tpu.memory_space<vmem>>, vector<1x128xf32>,
    return
  }
  func.func @transform_0(%arg0: i32) -> (i32, i32) {
    %c0_i32 = arith.constant 0 : i32
    %c0_i32_0 = arith.constant 0 : i32
    return %c0_i32, %arg0 : i32, i32
  }
  func.func @transform_1(%arg0: i32) -> (i32, i32) {
    %c0_i32 = arith.constant 0 : i32
    %c0_i32_0 = arith.constant 0 : i32
    return %c0_i32, %arg0 : i32, i32
  }
  func.func @transform_2(%arg0: i32) -> (i32, i32) {
    %c0_i32 = arith.constant 0 : i32
    %c0_i32_0 = arith.constant 0 : i32
    return %c0_i32, %arg0 : i32, i32
  }
}

</mosaic_0001>

<llo_original>
// kernel: tpu_custom_call.1
$region0: #{tpu_custom_call.1}
  #allocation0 [shape = 'u32[]', space=smem, size = 0x4, offset = 0x4, fixed_abs, tag = 'smem constant byte address 0x4 - core index']
  #allocation1 [shape = 'u32[72,128]{1,0:T(1,128)}', space=vmem, size = 0x9000, scoped, tag = 'internal scratch']
  %s0 = inlined_call_operand.hbm [shape: f32[1,256], index: 0, kind: input, shape index: {}]
  %s1 = inlined_call_operand.hbm [shape: f32[1,256], index: 1, kind: input, shape index: {}]
  %s2 = inlined_call_operand.hbm [shape: f32[3,256], index: 2, kind: output, shape index: {}]
  %s3 = sld [smem:[#allocation0]]
  $region49: #{tpu_custom_call.1} parent=0
    _
  %s5 = ssub.s32 1, %s3
  %s6 = scalar_select 0, %s5, %s3
  $region1: #{tpu_custom_call.1} parent=0
    #allocation2 [shape = 'u8[1024]{0}', space=vmem, size = 0x400, scoped, tag = 'input window, operand 0']
    #allocation3 [shape = 's32[2]{0}', space=sflag, size = 0x8, scoped, tag = 'scoped memory for tpu_custom_call.1']
    #allocation4 [shape = 's32[2]{0}', space=sflag, size = 0x8, scoped, tag = 'scoped memory for tpu_custom_call.1']
    #allocation5 [shape = 'u8[1024]{0}', space=vmem, size = 0x400, scoped, tag = 'input window, operand 1']
    #allocation6 [shape = 's32[2]{0}', space=sflag, size = 0x8, scoped, tag = 'scoped memory for tpu_custom_call.1']
    #allocation7 [shape = 'u8[4096]{0}', space=vmem, size = 0x1000, scoped, tag = 'output window, operand 0']
    %7 = vsyncpa [#allocation3], 0
    %s8 = scalar_lea.sflag [#allocation3], 1
    %9 = vsyncpa %s8, 0
    %10 = vsyncpa [#allocation6], 0
    %s11 = scalar_lea.sflag [#allocation6], 1
    %12 = vsyncpa %s11, 0
    %13 = vsyncpa [#allocation4], 0
    %s14 = scalar_lea.sflag [#allocation4], 1
    %15 = vsyncpa %s14, 0
    loop: start=0, step=1, limit=4
    $region2: #{tpu_custom_call.1} parent=1 // loop_pre_header
      _
    $region3: #{tpu_custom_call.1} parent=1 // loop_header
      %s17 = sphi 0, %s21
      %p18 = scmp.ge.s32.totalorder %s17, 4
      %s27 = sphi 0, %s29
      %s30 = sphi 0, %s27
      %s31 = sphi 0, %s30
      %s47 = sphi 0, %s31
      %s53 = sphi 0, %s55
      %s56 = sphi 0, %s53
      %s57 = sphi 0, %s56
      %s73 = sphi 0, %s57
      %s79 = sphi 0, %s81
      %s82 = sphi 0, %s79
      %s83 = sphi 0, %s82
      %s99 = sphi 0, %s83
    $region4: #{tpu_custom_call.1} parent=1 // loop_header_branch
      %20 = sbr.rel (%p18) target = $region8
    $region5: #{tpu_custom_call.1} parent=1 // loop_body
      %s22 = ssub.s32 %s17, 1
      %s23 = ssub.s32 %s17, 2
      %s24 = sadd.s32 %s17, 1
      %s25 = ssub.s32 %s17, %s24
      %p26 = scmp.eq.s32.totalorder %s25, 0
      %s28 = sadd.s32 %s27, 1
      %s29 = scalar_select %p26, %s27, %s28
      %p32 = pneg %p26
      %p33 = scmp.eq.s32.totalorder %s17, 1
      %p34 = por %p32, %p33
      %p35 = scmp.ne.s32.totalorder %s27, %s30
      %p36 = scmp.eq.s32.totalorder %s17, 0
      %p37 = por %p35, %p36
      %p38 = scmp.ne.s32.totalorder %s27, %s30
      %p39 = scmp.eq.s32.totalorder %s22, 1
      %p40 = por %p38, %p39
      %p41 = scmp.ne.s32.totalorder %s30, %s31
      %p42 = scmp.eq.s32.totalorder %s22, 0
      %p43 = por %p41, %p42
      %p44 = scmp.ne.s32.totalorder %s30, %s31
      %p45 = scmp.eq.s32.totalorder %s23, 1
      %p46 = por %p44, %p45
      %p48 = scmp.ne.s32.totalorder %s31, %s47
      %p49 = scmp.eq.s32.totalorder %s23, 0
      %p50 = por %p48, %p49
      %s51 = ssub.s32 %s17, %s24
      %p52 = scmp.eq.s32.totalorder %s51, 0
      %s54 = sadd.s32 %s53, 1
      %s55 = scalar_select %p52, %s53, %s54
      %p58 = pneg %p52
      %p59 = scmp.eq.s32.totalorder %s17, 1
      %p60 = por %p58, %p59
      %p61 = scmp.ne.s32.totalorder %s53, %s56
      %p62 = scmp.eq.s32.totalorder %s17, 0
      %p63 = por %p61, %p62
      %p64 = scmp.ne.s32.totalorder %s53, %s56
      %p65 = scmp.eq.s32.totalorder %s22, 1
      %p66 = por %p64, %p65
      %p67 = scmp.ne.s32.totalorder %s56, %s57
      %p68 = scmp.eq.s32.totalorder %s22, 0
      %p69 = por %p67, %p68
      %p70 = scmp.ne.s32.totalorder %s56, %s57
      %p71 = scmp.eq.s32.totalorder %s23, 1
      %p72 = por %p70, %p71
      %p74 = scmp.ne.s32.totalorder %s57, %s73
      %p75 = scmp.eq.s32.totalorder %s23, 0
      %p76 = por %p74, %p75
      %s77 = ssub.s32 %s17, %s24
      %p78 = scmp.eq.s32.totalorder %s77, 0
      %s80 = sadd.s32 %s79, 1
      %s81 = scalar_select %p78, %s79, %s80
      %p84 = pneg %p78
      %p85 = scmp.eq.s32.totalorder %s17, 1
      %p86 = por %p84, %p85
      %p87 = scmp.ne.s32.totalorder %s79, %s82
      %p88 = scmp.eq.s32.totalorder %s17, 0
      %p89 = por %p87, %p88
      %p90 = scmp.ne.s32.totalorder %s79, %s82
      %p91 = scmp.eq.s32.totalorder %s22, 1
      %p92 = por %p90, %p91
      %p93 = scmp.ne.s32.totalorder %s82, %s83
      %p94 = scmp.eq.s32.totalorder %s22, 0
      %p95 = por %p93, %p94
      %p96 = scmp.ne.s32.totalorder %s82, %s83
      %p97 = scmp.eq.s32.totalorder %s23, 1
      %p98 = por %p96, %p97
      %p100 = scmp.ne.s32.totalorder %s83, %s99
      %p101 = scmp.eq.s32.totalorder %s23, 0
      %p102 = por %p100, %p101
      %p103 = scmp.le.s32.totalorder 1, %s17
      %p104 = scmp.lt.s32.totalorder %s17, 3
      %p105 = pnand %p103, %p104
      %p106 = pneg %p105
      // Predicated region
      $region9: #{tpu_custom_call.1} parent=5 // pred_check
        _
      $region10: #{tpu_custom_call.1} parent=5 // pred_check_branch
        %108 = sbr.rel (%p105) target = $region12
      $region11: #{tpu_custom_call.1} parent=5 // pred_region
        %s109 = ssub.s32 %s17, 1
      $region12: #{tpu_custom_call.1} parent=5 // pred_fallthru
        _
      %p110 = scmp.lt.s32.totalorder %s17, 2
      // Predicated region
      $region13: #{tpu_custom_call.1} parent=5 // pred_check
        %p111 = pneg %p110
      $region14: #{tpu_custom_call.1} parent=5 // pred_check_branch
        %113 = sbr.rel (%p111) target = $region16
      $region15: #{tpu_custom_call.1} parent=5 // pred_region
        // Predicated region
        $region17: #{tpu_custom_call.1} parent=15 // pred_check
          %p114 = pneg %p37
        $region18: #{tpu_custom_call.1} parent=15 // pred_check_branch
          %116 = sbr.rel (%p114) target = $region20
        $region19: #{tpu_custom_call.1} parent=15 // pred_region
          %s117 = sand.u32 %s27, 1
          %s118 = scalar_lea.sflag [#allocation3], %s117
          %s119 = sand.u32 %s27, 1
          %s120 = scalar_lea.vmem [#allocation2], %s119
          %122 = vsyncadd %s118, 0
          %s123 = scalar_lea.hbm %s0, %s17
          %s125 = sshll.u32 %s123, 4
          %s126 = int_to_ptr.hbm [resolvable:$true] %s125
          %s127 = sshll.u32 %s120, 4
          %s128 = int_to_ptr.vmem [resolvable:$true] %s127
          %130 = dma.hbm_to_vmem [thread:$0]  %s126, 16, %s128, %s118
        $region20: #{tpu_custom_call.1} parent=15 // pred_fallthru
          _
        // Predicated region
        $region21: #{tpu_custom_call.1} parent=15 // pred_check
          %p131 = pneg %p63
        $region22: #{tpu_custom_call.1} parent=15 // pred_check_branch
          %133 = sbr.rel (%p131) target = $region24
        $region23: #{tpu_custom_call.1} parent=15 // pred_region
          %s134 = sand.u32 %s53, 1
          %s135 = scalar_lea.sflag [#allocation6], %s134
          %s136 = sand.u32 %s53, 1
          %s137 = scalar_lea.vmem [#allocation5], %s136
          %139 = vsyncadd %s135, 0
          %s140 = scalar_lea.hbm %s1, %s17
          %s142 = sshll.u32 %s140, 4
          %s143 = int_to_ptr.hbm [resolvable:$true] %s142
          %s144 = sshll.u32 %s137, 4
          %s145 = int_to_ptr.vmem [resolvable:$true] %s144
          %147 = dma.hbm_to_vmem [thread:$0]  %s143, 16, %s145, %s135
        $region24: #{tpu_custom_call.1} parent=15 // pred_fallthru
          _
      $region16: #{tpu_custom_call.1} parent=5 // pred_fallthru
        _
      %p148 = scmp.le.s32.totalorder 1, %s17
      %p149 = scmp.lt.s32.totalorder %s17, 3
      %p150 = pnand %p148, %p149
      %p151 = pneg %p150
      // Predicated region
      $region25: #{tpu_custom_call.1} parent=5 // pred_check
        _
      $region26: #{tpu_custom_call.1} parent=5 // pred_check_branch
        %153 = sbr.rel (%p150) target = $region28
      $region27: #{tpu_custom_call.1} parent=5 // pred_region
        %s154 = ssub.s32 %s17, 1
        %s155 = sand.u32 %s30, 1
        %s156 = scalar_lea.sflag [#allocation3], %s155
        %s157 = sand.u32 %s30, 1
        %s158 = scalar_lea.vmem [#allocation2], %s157
        // Predicated region
        $region29: #{tpu_custom_call.1} parent=27 // pred_check
          %p159 = pneg %p43
        $region30: #{tpu_custom_call.1} parent=27 // pred_check_branch
          %161 = sbr.rel (%p159) target = $region32
        $region31: #{tpu_custom_call.1} parent=27 // pred_region
          %163 = dma.done %s156, 16
        $region32: #{tpu_custom_call.1} parent=27 // pred_fallthru
          _
        %s164 = sand.u32 %s56, 1
        %s165 = scalar_lea.sflag [#allocation6], %s164
        %s166 = sand.u32 %s56, 1
        %s167 = scalar_lea.vmem [#allocation5], %s166
        // Predicated region
        $region33: #{tpu_custom_call.1} parent=27 // pred_check
          %p168 = pneg %p69
        $region34: #{tpu_custom_call.1} parent=27 // pred_check_branch
          %170 = sbr.rel (%p168) target = $region36
        $region35: #{tpu_custom_call.1} parent=27 // pred_region
          %172 = dma.done %s165, 16
        $region36: #{tpu_custom_call.1} parent=27 // pred_fallthru
          _
        %s173 = sand.u32 %s30, 1
        %s174 = scalar_lea.sflag [#allocation3], %s173
        %s175 = sand.u32 %s30, 1
        %s176 = scalar_lea.vmem [#allocation2], %s175
        %p177 = pneg %p43
        %p178 = pneg %p40
        %s179 = sand.u32 %s56, 1
        %s180 = scalar_lea.sflag [#allocation6], %s179
        %s181 = sand.u32 %s56, 1
        %s182 = scalar_lea.vmem [#allocation5], %s181
        %p183 = pneg %p69
        %p184 = pneg %p66
        %p185 = pneg %p95
        %p186 = pneg %p92
        %s187 = sand.u32 %s82, 1
        %s188 = scalar_lea.sflag [#allocation4], %s187
        %s189 = sand.u32 %s82, 1
        %s190 = smul.addr %s189, 4
        %s191 = scalar_lea.vmem [#allocation7], %s190
        %v192 = vld [vmem:[%s158] sm:$0x1]
        %v193 = vld [vmem:[%s167] sm:$0x1]
        %vm194 = vcmp.lt.f32.partialorder %v192, 0.0
        %v195 = vceil.f32 %v192
        %v196 = vfloor.f32 %v192
        %v197 = vsel %vm194, %v195, %v196
        %v198 = vsub.f32 %v192, %v197
        %vm199 = vcmp.lt.f32.partialorder %v193, 0.0
        %v200 = vceil.f32 %v193
        %v201 = vfloor.f32 %v193
        %v202 = vsel %vm199, %v200, %v201
        %v203 = vsub.f32 %v193, %v202
        %v204 = vmul.f32 %v198, 6.2831855
        %v205 = vmul.f32 %v203, 2.0
        %v206 = vsub.f32 %v205, 1.0
        %v207 = vmax.f32 %v206, -1.0
        %v208 = vmin.f32 %v207, 1.0
        %v209 = vmul.f32 %v208, %v208
        %v210 = vsub.f32 1.0, %v209
        %v211 = vmax.f32 %v210, 0.0
        %v212 = vrsqrt.pop %v211
        %v213 = vmul.f32 %v212, %v211
        %v214 = vmul.f32 %v213, %v212
        %v215 = vmul.f32 0.5, %v214
        %v216 = vsub.f32 1.5, %v215
        %v217 = vmul.f32 %v212, %v216
        %v218 = vmul.f32 %v211, %v217
        %vm219 = vcmp.eq.f32.partialorder %v211, inf
        %v220 = vsel %vm219, %v211, %v218
        %vm221 = vcmp.eq.f32.partialorder %v211, 0.0
        %v222 = vand.u32 %v211, 2147483648
        %v223 = vsel %vm221, %v222, %v220
        %v224 = vand.u32 2147483647, %v204
        %vm225 = vcmp.le.f32.partialorder %v224, 0.7853982
        %vm226 = vcmp.lt.s32.totalorder %v204, 0
        %v227 = vand.u32 %v204, 2139095040
        %v228 = vshrl.u32 %v227, 23
        %v229 = vsub.s32 %v228, 127
        %v230 = vand.u32 2147483647, %v204
        %v231 = vand.u32 %v230, 8388607
        %v232 = vor.u32 %v231, 8388608
        %v233 = vsub.s32 0, %v232
        %v234 = vadd.s32 %v229, 1
        %vm235 = vcmp.gt.s32.totalorder %v234, 0
        %v236 = vsel %vm235, %v234, 0
        %v237 = vshrl.u32 %v236, 5
        %v238 = vand.u32 %v236, 31
        %v239 = vsub.s32 32, %v238
        %v240 = vshrl.u32 683565275, %v239
        %v241 = vshll.u32 683565275, %v238
        %v242 = vshrl.u32 2475754826, %v239
        %v243 = vor.u32 %v241, %v242
        %v244 = vshll.u32 2475754826, %v238
        %v245 = vshrl.u32 2131351028, %v239
        %v246 = vor.u32 %v244, %v245
        %v247 = vshll.u32 2131351028, %v238
        %v248 = vshrl.u32 2102212464, %v239
        %v249 = vor.u32 %v247, %v248
        %v250 = vshll.u32 2102212464, %v238
        %v251 = vshrl.u32 920167782, %v239
        %v252 = vor.u32 %v250, %v251
        %v253 = vshll.u32 920167782, %v238
        %v254 = vshrl.u32 1326507024, %v239
        %v255 = vor.u32 %v253, %v254
        %vm256 = vcmp.lt.s32.totalorder %v237, 1
        %vm257 = vcmp.lt.s32.totalorder %v237, 2
        %vm258 = vcmp.lt.s32.totalorder %v237, 3
        %vm259 = vcmp.lt.s32.totalorder %v237, 4
        %v260 = vsel %vm256, %v240, %v243
        %v261 = vsel %vm259, %v249, 2102212464
        %v262 = vsel %vm258, %v246, %v261
        %v263 = vsel %vm257, %v260, %v262
        %v264 = vsel %vm256, %v243, %v246
        %v265 = vsel %vm259, %v252, 920167782
        %v266 = vsel %vm258, %v249, %v265
        %v267 = vsel %vm257, %v264, %v266
        %v268 = vsel %vm256, %v246, %v249
        %v269 = vsel %vm259, %v255, 1326507024
        %v270 = vsel %vm258, %v252, %v269
        %v271 = vsel %vm257, %v268, %v270
        %v272 = vshll.u32 %v232, 8
        %v273 = vand.u32 %v272, 65535
        %v274 = vshrl.u32 %v272, 16
        %v275 = vand.u32 %v271, 65535
        %v276 = vshrl.u32 %v271, 16
        %v277 = vmul.u32 %v273, %v275
        %v278 = vmul.u32 %v273, %v276
        %v279 = vmul.u32 %v274, %v275
        %v280 = vmul.u32 %v274, %v276
        %v281 = vshll.u32 %v278, 16
        %v282 = vshrl.u32 %v278, 16
        %v283 = vshll.u32 %v279, 16
        %v284 = vshrl.u32 %v279, 16
        %vm285 = vc.u32 %v277, %v281
        %v286 = vsel %vm285, 1, 0
        %v287 = vadd.s32 %v277, %v281
        %v288 = vadd.s32 %v280, %v286
        %vm289 = vc.u32 %v287, %v283
        %v290 = vsel %vm289, 1, 0
        %v291 = vadd.s32 %v287, %v283
        %v292 = vadd.s32 %v288, %v290
        %v293 = vadd.s32 %v292, %v282
        %v294 = vadd.s32 %v293, %v284
        %v295 = vand.u32 %v272, 65535
        %v296 = vshrl.u32 %v272, 16
        %v297 = vand.u32 %v267, 65535
        %v298 = vshrl.u32 %v267, 16
        %v299 = vmul.u32 %v295, %v297
        %v300 = vmul.u32 %v295, %v298
        %v301 = vmul.u32 %v296, %v297
        %v302 = vmul.u32 %v296, %v298
        %v303 = vshll.u32 %v300, 16
        %v304 = vshrl.u32 %v300, 16
        %v305 = vshll.u32 %v301, 16
        %v306 = vshrl.u32 %v301, 16
        %vm307 = vc.u32 %v299, %v303
        %v308 = vsel %vm307, 1, 0
        %v309 = vadd.s32 %v299, %v303
        %v310 = vadd.s32 %v302, %v308
        %vm311 = vc.u32 %v309, %v305
        %v312 = vsel %vm311, 1, 0
        %v313 = vadd.s32 %v309, %v305
        %v314 = vadd.s32 %v310, %v312
        %v315 = vadd.s32 %v314, %v304
        %v316 = vadd.s32 %v315, %v306
        %v317 = vmul.u32 %v272, %v263
        %v318 = vadd.s32 %v294, %v313
        %vm319 = vc.u32 %v294, %v313
        %v320 = vadd.s32 %v316, 1
        %v321 = vsel %vm319, %v320, %v316
        %v322 = vadd.s32 %v317, %v321
        %v323 = vadd.s32 %v322, 536870912
        %v324 = vshrl.u32 %v323, 30
        %v325 = vshll.u32 %v324, 30
        %v326 = vsub.s32 %v322, %v325
        %vm327 = vcmp.lt.s32.totalorder %v326, 0
        %v328 = vsub.s32 0, %v326
        %v329 = vsel %vm327, %v328, %v326
        %v330 = vclz %v329
        %v331 = vsub.s32 %v330, 2
        %vm332 = vcmp.gt.s32.totalorder 0, %v331
        %v333 = vsel %vm332, 0, %v331
        %v334 = vsub.s32 32, %v333
        %v335 = vshll.u32 %v326, %v333
        %v336 = vshrl.u32 %v318, %v334
        %v337 = vor.u32 %v335, %v336
        %v338 = vsub.s32 4294967266, %v333
        %v339 = vadd.s32 %v338, 127
        %v340 = vshll.u32 %v339, 23
        %v341 = vor.u32 4788187, %v340
        %v342 = vand.u32 2147483647, %v341
        %v344 = vcvt.s32.f32 %v337
        %v345 = vmul.f32 %v344, %v342
        %v346 = vxor.u32 %v345, 2147483648
        %v347 = vsel %vm226, %v346, %v345
        %v348 = vsub.s32 4, %v324
        %v349 = vsel %vm226, %v348, %v324
        %v350 = vsel %vm225, %v204, %v347
        %v351 = vsel %vm225, 0, %v349
        %v352 = vmul.f32 %v350, %v350
        %v353 = vmul.f32 %v352, -0.001358992
        %v354 = vadd.f32 %v353, 0.041655596
        %v355 = vmul.f32 %v352, %v354
        %v356 = vadd.f32 %v355, -0.4999988
        %v357 = vmul.f32 %v352, %v356
        %v358 = vadd.f32 1.0, %v357
        %v359 = vmul.f32 %v350, %v350
        %v360 = vmul.f32 %v359, -0.00019511016
        %v361 = vadd.f32 %v360, 0.008332121
        %v362 = vmul.f32 %v359, %v361
        %v363 = vadd.f32 %v362, -0.16666654
        %v364 = vmul.f32 %v359, %v363
        %v365 = vadd.f32 %v364, 1.0
        %v366 = vmul.f32 %v365, %v350
        %vm367 = vweird.f32 %v204
        %v368 = vand.u32 %v351, 3
        %vm369 = vcmp.lt.s32.totalorder %v368, 2
        %vm370 = vcmp.eq.s32.totalorder %v368, 0
        %v371 = vxor.u32 %v366, 2147483648
        %v372 = vsel %vm370, %v358, %v371
        %vm373 = vcmp.eq.s32.totalorder %v368, 2
        %v374 = vxor.u32 %v358, 2147483648
        %v375 = vsel %vm373, %v374, %v366
        %v376 = vsel %vm369, %v372, %v375
        %v377 = vsel %vm367, nan, %v376
        %v378 = vmul.f32 %v377, %v223
        %379 = vst [vmem:[%s191] sm:$0x1] %v378
        %v380 = vand.u32 2147483647, %v204
        %vm381 = vcmp.le.f32.partialorder %v380, 0.7853982
        %vm382 = vcmp.lt.s32.totalorder %v204, 0
        %v383 = vand.u32 %v204, 2139095040
        %v384 = vshrl.u32 %v383, 23
        %v385 = vsub.s32 %v384, 127
        %v386 = vand.u32 2147483647, %v204
        %v387 = vand.u32 %v386, 8388607
        %v388 = vor.u32 %v387, 8388608
        %v389 = vsub.s32 0, %v388
        %v390 = vadd.s32 %v385, 1
        %vm391 = vcmp.gt.s32.totalorder %v390, 0
        %v392 = vsel %vm391, %v390, 0
        %v393 = vshrl.u32 %v392, 5
        %v394 = vand.u32 %v392, 31
        %v395 = vsub.s32 32, %v394
        %v396 = vshrl.u32 683565275, %v395
        %v397 = vshll.u32 683565275, %v394
        %v398 = vshrl.u32 2475754826, %v395
        %v399 = vor.u32 %v397, %v398
        %v400 = vshll.u32 2475754826, %v394
        %v401 = vshrl.u32 2131351028, %v395
        %v402 = vor.u32 %v400, %v401
        %v403 = vshll.u32 2131351028, %v394
        %v404 = vshrl.u32 2102212464, %v395
        %v405 = vor.u32 %v403, %v404
        %v406 = vshll.u32 2102212464, %v394
        %v407 = vshrl.u32 920167782, %v395
        %v408 = vor.u32 %v406, %v407
        %v409 = vshll.u32 920167782, %v394
        %v410 = vshrl.u32 1326507024, %v395
        %v411 = vor.u32 %v409, %v410
        %vm412 = vcmp.lt.s32.totalorder %v393, 1
        %vm413 = vcmp.lt.s32.totalorder %v393, 2
        %vm414 = vcmp.lt.s32.totalorder %v393, 3
        %vm415 = vcmp.lt.s32.totalorder %v393, 4
        %v416 = vsel %vm412, %v396, %v399
        %v417 = vsel %vm415, %v405, 2102212464
        %v418 = vsel %vm414, %v402, %v417
        %v419 = vsel %vm413, %v416, %v418
        %v420 = vsel %vm412, %v399, %v402
        %v421 = vsel %vm415, %v408, 920167782
        %v422 = vsel %vm414, %v405, %v421
        %v423 = vsel %vm413, %v420, %v422
        %v424 = vsel %vm412, %v402, %v405
        %v425 = vsel %vm415, %v411, 1326507024
        %v426 = vsel %vm414, %v408, %v425
        %v427 = vsel %vm413, %v424, %v426
        %v428 = vshll.u32 %v388, 8
        %v429 = vand.u32 %v428, 65535
        %v430 = vshrl.u32 %v428, 16
        %v431 = vand.u32 %v427, 65535
        %v432 = vshrl.u32 %v427, 16
        %v433 = vmul.u32 %v429, %v431
        %v434 = vmul.u32 %v429, %v432
        %v435 = vmul.u32 %v430, %v431
        %v436 = vmul.u32 %v430, %v432
        %v437 = vshll.u32 %v434, 16
        %v438 = vshrl.u32 %v434, 16
        %v439 = vshll.u32 %v435, 16
        %v440 = vshrl.u32 %v435, 16
        %vm441 = vc.u32 %v433, %v437
        %v442 = vsel %vm441, 1, 0
        %v443 = vadd.s32 %v433, %v437
        %v444 = vadd.s32 %v436, %v442
        %vm445 = vc.u32 %v443, %v439
        %v446 = vsel %vm445, 1, 0
        %v447 = vadd.s32 %v443, %v439
        %v448 = vadd.s32 %v444, %v446
        %v449 = vadd.s32 %v448, %v438
        %v450 = vadd.s32 %v449, %v440
        %v451 = vand.u32 %v428, 65535
        %v452 = vshrl.u32 %v428, 16
        %v453 = vand.u32 %v423, 65535
        %v454 = vshrl.u32 %v423, 16
        %v455 = vmul.u32 %v451, %v453
        %v456 = vmul.u32 %v451, %v454
        %v457 = vmul.u32 %v452, %v453
        %v458 = vmul.u32 %v452, %v454
        %v459 = vshll.u32 %v456, 16
        %v460 = vshrl.u32 %v456, 16
        %v461 = vshll.u32 %v457, 16
        %v462 = vshrl.u32 %v457, 16
        %vm463 = vc.u32 %v455, %v459
        %v464 = vsel %vm463, 1, 0
        %v465 = vadd.s32 %v455, %v459
        %v466 = vadd.s32 %v458, %v464
        %vm467 = vc.u32 %v465, %v461
        %v468 = vsel %vm467, 1, 0
        %v469 = vadd.s32 %v465, %v461
        %v470 = vadd.s32 %v466, %v468
        %v471 = vadd.s32 %v470, %v460
        %v472 = vadd.s32 %v471, %v462
        %v473 = vmul.u32 %v428, %v419
        %v474 = vadd.s32 %v450, %v469
        %vm475 = vc.u32 %v450, %v469
        %v476 = vadd.s32 %v472, 1
        %v477 = vsel %vm475, %v476, %v472
        %v478 = vadd.s32 %v473, %v477
        %v479 = vadd.s32 %v478, 536870912
        %v480 = vshrl.u32 %v479, 30
        %v481 = vshll.u32 %v480, 30
        %v482 = vsub.s32 %v478, %v481
        %vm483 = vcmp.lt.s32.totalorder %v482, 0
        %v484 = vsub.s32 0, %v482
        %v485 = vsel %vm483, %v484, %v482
        %v486 = vclz %v485
        %v487 = vsub.s32 %v486, 2
        %vm488 = vcmp.gt.s32.totalorder 0, %v487
        %v489 = vsel %vm488, 0, %v487
        %v490 = vsub.s32 32, %v489
        %v491 = vshll.u32 %v482, %v489
        %v492 = vshrl.u32 %v474, %v490
        %v493 = vor.u32 %v491, %v492
        %v494 = vsub.s32 4294967266, %v489
        %v495 = vadd.s32 %v494, 127
        %v496 = vshll.u32 %v495, 23
        %v497 = vor.u32 4788187, %v496
        %v498 = vand.u32 2147483647, %v497
        %v500 = vcvt.s32.f32 %v493
        %v501 = vmul.f32 %v500, %v498
        %v502 = vxor.u32 %v501, 2147483648
        %v503 = vsel %vm382, %v502, %v501
        %v504 = vsub.s32 4, %v480
        %v505 = vsel %vm382, %v504, %v480
        %v506 = vsel %vm381, %v204, %v503
        %v507 = vsel %vm381, 0, %v505
        %v508 = vmul.f32 %v506, %v506
        %v509 = vmul.f32 %v508, -0.001358992
        %v510 = vadd.f32 %v509, 0.041655596
        %v511 = vmul.f32 %v508, %v510
        %v512 = vadd.f32 %v511, -0.4999988
        %v513 = vmul.f32 %v508, %v512
        %v514 = vadd.f32 1.0, %v513
        %v515 = vmul.f32 %v506, %v506
        %v516 = vmul.f32 %v515, -0.00019511016
        %v517 = vadd.f32 %v516, 0.008332121
        %v518 = vmul.f32 %v515, %v517
        %v519 = vadd.f32 %v518, -0.16666654
        %v520 = vmul.f32 %v515, %v519
        %v521 = vadd.f32 %v520, 1.0
        %v522 = vmul.f32 %v521, %v506
        %vm523 = vweird.f32 %v204
        %v524 = vadd.s32 %v507, 3
        %v525 = vand.u32 %v524, 3
        %vm526 = vcmp.lt.s32.totalorder %v525, 2
        %vm527 = vcmp.eq.s32.totalorder %v525, 0
        %v528 = vxor.u32 %v522, 2147483648
        %v529 = vsel %vm527, %v514, %v528
        %vm530 = vcmp.eq.s32.totalorder %v525, 2
        %v531 = vxor.u32 %v514, 2147483648
        %v532 = vsel %vm530, %v531, %v522
        %v533 = vsel %vm526, %v529, %v532
        %v534 = vsel %vm523, nan, %v533
        %v535 = vmul.f32 %v534, %v223
        %536 = vst [vmem:[%s191 + $0x1] sm:$0x1] %v535
        %537 = vst [vmem:[%s191 + $0x2] sm:$0x1] %v208
        %s538 = sand.u32 %s82, 1
        %s539 = scalar_lea.sflag [#allocation4], %s538
        %s540 = sand.u32 %s82, 1
        %s541 = smul.addr %s540, 4
        %s542 = scalar_lea.vmem [#allocation7], %s541
        // Predicated region
        $region37: #{tpu_custom_call.1} parent=27 // pred_check
          %p543 = pneg %p92
        $region38: #{tpu_custom_call.1} parent=27 // pred_check_branch
          %545 = sbr.rel (%p543) target = $region40
        $region39: #{tpu_custom_call.1} parent=27 // pred_region
          %547 = vsyncadd %s539, 0
          %s548 = smul.addr %s22, 4
          %s549 = scalar_lea.hbm %s2, %s548
          %s551 = sshll.u32 %s542, 4
          %s552 = int_to_ptr.vmem [resolvable:$true] %s551
          %s553 = sshll.u32 %s549, 4
          %s554 = int_to_ptr.hbm [resolvable:$true] %s553
          %556 = dma.vmem_to_hbm [thread:$0]  %s552, 64, %s554, %s539
        $region40: #{tpu_custom_call.1} parent=27 // pred_fallthru
          _
      $region28: #{tpu_custom_call.1} parent=5 // pred_fallthru
        _
      %p557 = scmp.le.s32.totalorder 2, %s17
      // Predicated region
      $region41: #{tpu_custom_call.1} parent=5 // pred_check
        %p558 = pneg %p557
      $region42: #{tpu_custom_call.1} parent=5 // pred_check_branch
        %560 = sbr.rel (%p558) target = $region44
      $region43: #{tpu_custom_call.1} parent=5 // pred_region
        %s561 = ssub.s32 %s17, 2
        // Predicated region
        $region45: #{tpu_custom_call.1} parent=43 // pred_check
          %p562 = pneg %p98
        $region46: #{tpu_custom_call.1} parent=43 // pred_check_branch
          %564 = sbr.rel (%p562) target = $region48
        $region47: #{tpu_custom_call.1} parent=43 // pred_region
          %s565 = sand.u32 %s83, 1
          %s566 = scalar_lea.sflag [#allocation4], %s565
          %s567 = sand.u32 %s83, 1
          %s568 = smul.addr %s567, 4
          %s569 = scalar_lea.vmem [#allocation7], %s568
          %571 = dma.done %s566, 64
        $region48: #{tpu_custom_call.1} parent=43 // pred_fallthru
          _
      $region44: #{tpu_custom_call.1} parent=5 // pred_fallthru
        _
    $region6: #{tpu_custom_call.1} parent=1 // loop_footer
      %s21 = sadd.s32 1, %s17
    $region7: #{tpu_custom_call.1} parent=1 // loop_footer_branch
      %16 = sbr.rel target = $region3
    $region8: #{tpu_custom_call.1} parent=1 // loop_exit
      _
    %572 = vsyncpa [#allocation3], 1
    %s573 = scalar_lea.sflag [#allocation3], 1
    %574 = vsyncpa %s573, 1
    %575 = vsyncpa [#allocation6], 1
    %s576 = scalar_lea.sflag [#allocation6], 1
    %577 = vsyncpa %s576, 1
    %578 = vsyncpa [#allocation4], 1
    %s579 = scalar_lea.sflag [#allocation4], 1
    %580 = vsyncpa %s579, 1

</llo_original>
